<compile_context>
chip_gen: v7x
topology: tpu7x:2x2x1
jax: 0.10.0
libtpu: 0.0.40
codegen_flags: <defaults>
</compile_context>

<pallas_src>
import jax
import jax.numpy as jnp
from jax.experimental import pallas as pl
from jax.experimental.pallas import tpu as pltpu


def _round_up(x: int, m: int) -> int:
    return ((x + m - 1) // m) * m


def _qa_match_kernel(resp_ref, ans_ref, score_ref, pred_ref):
    """One (batch-tile, sequence-chunk) grid step.

    resp_ref : [TB, SC] token ids (int16/int32)
    ans_ref  : [A,  SC] token ids (int16/int32)
    score_ref: [A,  TB] int32 -- lane-dense (batch on lanes); acts as the
               accumulator across the sequence-chunk ("arbitrary") grid axis.
    pred_ref : [1,  TB] int32 -- argmax over answers, written on the last chunk.
    """
    s_idx = pl.program_id(1)

    @pl.when(s_idx == 0)
    def _init():
        score_ref[...] = jnp.zeros_like(score_ref)

    # Widen inside the kernel so HBM/DMA traffic stays at the narrow dtype.
    resp = resp_ref[...].astype(jnp.int32)        # [TB, SC]
    ans = ans_ref[...].astype(jnp.int32)          # [A, SC]

    # Token agreement for this sequence chunk, answers-major so the reduced
    # result [A, TB] is lane-dense (batch on the 128-lane axis).
    eq = ans[:, None, :] == resp[None, :, :]      # [A, TB, SC] bool
    score_ref[...] += jnp.sum(eq, axis=-1, dtype=jnp.int32)

    @pl.when(s_idx == pl.num_programs(1) - 1)
    def _finalize():
        scores = score_ref[...]                                       # [A, TB]
        num_answers = scores.shape[0]
        max_s = jnp.max(scores, axis=0, keepdims=True)                # [1, TB]
        idx = jax.lax.broadcasted_iota(jnp.int32, scores.shape, 0)    # [A, TB]
        # argmax over answers (first max on ties, matching torch.argmax).
        pred_ref[...] = jnp.min(
            jnp.where(scores == max_s, idx, jnp.int32(num_answers)),
            axis=0,
            keepdims=True,
        )                                                             # [1, TB]


def qa_predict(qa_responses: jnp.ndarray, answer_token_table: jnp.ndarray,
               *, block_b: int = None, block_s: int = 512):
    """responses [B, S] int, answers [A, S] int -> (scores [B, A] i32, preds [B] i32)."""
    B, S = qa_responses.shape
    A, S2 = answer_token_table.shape
    assert S == S2, "response / answer sequence lengths must match"
    itemsize = jnp.dtype(qa_responses.dtype).itemsize

    # Sequence chunk (lane dim must be a multiple of 128 or the full extent).
    SC = min(_round_up(block_s, 128), _round_up(S, 128))
    Sp = _round_up(S, SC)

    # Batch tile: bound the [A, TB, SC] compare intermediate to ~4 MiB
    # (int32-equivalent), while keeping TB a multiple of 128 for dense
    # (unmasked) lane stores whenever the batch is actually tiled.
    if block_b is None:
        tb = (4 * 1024 * 1024) // max(1, A * SC * 4)
        block_b = max(128, min(1024, (tb // 128) * 128))
    B8 = _round_up(B, 8)
    TB = B8 if B8 <= block_b else block_b
    Bp = _round_up(B, TB)

    resp = qa_responses
    ans = answer_token_table
    if (Bp, Sp) != (B, S):
        # Distinct pad sentinels so padded positions never match -> exact scores.
        resp = jnp.pad(resp, ((0, Bp - B), (0, Sp - S)), constant_values=-1)
    if Sp != S:
        ans = jnp.pad(ans, ((0, 0), (0, Sp - S)), constant_values=-2)

    grid = (Bp // TB, Sp // SC)

    scores_t, preds_t = pl.pallas_call(
        _qa_match_kernel,
        out_shape=(
            jax.ShapeDtypeStruct((A, Bp), jnp.int32),   # lane-dense scores
            jax.ShapeDtypeStruct((1, Bp), jnp.int32),   # lane-dense preds
        ),
        grid=grid,
        in_specs=[
            pl.BlockSpec((TB, SC), lambda i, s: (i, s)),   # responses: tiled B and S
            pl.BlockSpec((A, SC), lambda i, s: (0, s)),    # answer table chunk
        ],
        out_specs=(
            pl.BlockSpec((A, TB), lambda i, s: (0, i)),    # resident across S axis
            pl.BlockSpec((1, TB), lambda i, s: (0, i)),
        ),
        compiler_params=pltpu.CompilerParams(
            dimension_semantics=("parallel", "arbitrary")),
        cost_estimate=pl.CostEstimate(
            flops=2 * Bp * A * Sp,
            transcendentals=0,
            bytes_accessed=(Bp * Sp + A * Sp) * itemsize + (A + 1) * Bp * 4,
        ),
    )(resp, ans)

    scores = scores_t.T[:B]      # [B, A]
    preds = preds_t[0, :B]       # [B]
    return scores, preds


class QAModuleJax:
    """JAX/Pallas counterpart of pytorch_gleam QAModule."""

    def __init__(self, num_answers: int, seq_len: int, vocab_size: int, seed: int = 0):
        # Deterministic synthetic "answer token table" parameter (no checkpoint).
        key = jax.random.PRNGKey(seed)
        table = jax.random.randint(
            key, (num_answers, seq_len), 0, vocab_size, dtype=jnp.int32
        )
        # Store token ids narrow when the vocab fits: halves HBM->VMEM DMA volume.
        self.token_dtype = jnp.int16 if vocab_size <= 32767 else jnp.int32
        self.answer_token_table = table.astype(self.token_dtype)

    def generate(self, body, label=None, context=None):
        # TODO(synk): tokenisation / prompt templating / regex answer parsing is
        # string processing with no Pallas equivalent; only the numeric forward
        # path is implemented.
        raise NotImplementedError

    def forward(self, qa_ids, qa_responses):
        resp = qa_responses.astype(self.token_dtype)
        _, preds = qa_predict(resp, self.answer_token_table)
        return qa_ids, preds


if __name__ == "__main__":
    # Small shapes: 8 QA examples, 128-token responses, 8 candidate answers.
    B, S, A, V = 8, 128, 8, 32
    key = jax.random.PRNGKey(0)
    k_resp, _ = jax.random.split(key)

    qa_responses = jax.random.randint(k_resp, (B, S), 0, V, dtype=jnp.int32)
    qa_ids = [f"q{i}" for i in range(B)]

    module = QAModuleJax(num_answers=A, seq_len=S, vocab_size=V, seed=1)

    out_ids, preds = module.forward(qa_ids, qa_responses)
    scores, preds_direct = qa_predict(
        qa_responses.astype(module.token_dtype), module.answer_token_table
    )
    preds = jax.block_until_ready(preds)
    scores = jax.block_until_ready(scores)
    preds_direct = jax.block_until_ready(preds_direct)

    # Pure-JAX reference check.
    table_i32 = module.answer_token_table.astype(jnp.int32)
    ref_scores = jnp.sum(
        (qa_responses[:, None, :] == table_i32[None, :, :]).astype(jnp.int32),
        axis=-1,
    )
    ref_preds = jnp.argmax(ref_scores, axis=-1).astype(jnp.int32)

    assert out_ids == qa_ids
    assert jnp.array_equal(scores, ref_scores), "score mismatch"
    assert jnp.array_equal(preds, ref_preds), "prediction mismatch"
    assert jnp.array_equal(preds_direct, ref_preds), "prediction mismatch (direct)"

    print("KERNEL_OK")
</pallas_src>

<mosaic_0001>
module attributes {stable_mosaic.version = 11 : i64} {
  func.func @_qa_match_kernel(%arg0: i32, %arg1: i32, %arg2: memref<8x128xi16, #tpu.memory_space<vmem>>, %arg3: memref<8x128xi16, #tpu.memory_space<vmem>>, %arg4: memref<8x8xi32, #tpu.memory_space<vmem>>, %arg5: memref<1x8xi32, #tpu.memory_space<vmem>>) attributes {dimension_semantics = [#tpu.dimension_semantics<parallel>, #tpu.dimension_semantics<arbitrary>], iteration_bounds = array<i64: 1, 1>, scalar_prefetch = 0 : i64, scratch_operands = 0 : i64, tpu.core_type = #tpu.core_type<tc>, window_params = [{transform_indices = @transform_0, window_bounds = array<i64: 8, 128>}, {transform_indices = @transform_1, window_bounds = array<i64: 8, 128>}, {transform_indices = @transform_2, window_bounds = array<i64: 8, 8>}, {transform_indices = @transform_3, window_bounds = array<i64: 1, 8>}]} {
    %c0_i32 = arith.constant 0 : i32
    %0 = arith.cmpi eq, %arg1, %c0_i32 : i32
    %1 = arith.extui %0 : i1 to i32
    %c0_i32_0 = arith.constant 0 : i32
    %2 = arith.cmpi ne, %1, %c0_i32_0 : i32
    scf.if %2 {
      %c0_i32_10 = arith.constant 0 : i32
      %20 = vector.broadcast %c0_i32_10 : i32 to vector<8x8xi32>
      %c0_11 = arith.constant 0 : index
      %c0_12 = arith.constant 0 : index
      %21 = vector.load %arg4[%c0_11, %c0_12] : memref<8x8xi32, #tpu.memory_space<vmem>>, vector<8x8xi32>
      tpu.vector_store %arg4[%c0_11, %c0_12], %20 {strides = array<i32>} : memref<8x8xi32, #tpu.memory_space<vmem>>, vector<8x8xi32>,
    } else {
    }
    %c0 = arith.constant 0 : index
    %c0_1 = arith.constant 0 : index
    %3 = vector.load %arg2[%c0, %c0_1] : memref<8x128xi16, #tpu.memory_space<vmem>>, vector<8x128xi16>
    %4 = arith.extsi %3 : vector<8x128xi16> to vector<8x128xi32>
    %c0_2 = arith.constant 0 : index
    %c0_3 = arith.constant 0 : index
    %5 = vector.load %arg3[%c0_2, %c0_3] : memref<8x128xi16, #tpu.memory_space<vmem>>, vector<8x128xi16>
    %6 = arith.extsi %5 : vector<8x128xi16> to vector<8x128xi32>
    %7 = vector.shape_cast %6 : vector<8x128xi32> to vector<8x1x128xi32>
    %8 = vector.shape_cast %4 : vector<8x128xi32> to vector<1x8x128xi32>
    %9 = vector.broadcast %7 : vector<8x1x128xi32> to vector<8x8x128xi32>
    %10 = vector.broadcast %8 : vector<1x8x128xi32> to vector<8x8x128xi32>
    %11 = arith.cmpi eq, %9, %10 : vector<8x8x128xi32>
    %c0_4 = arith.constant 0 : index
    %c0_5 = arith.constant 0 : index
    %12 = vector.load %arg4[%c0_4, %c0_5] : memref<8x8xi32, #tpu.memory_space<vmem>>, vector<8x8xi32>
    %13 = arith.extui %11 : vector<8x8x128xi1> to vector<8x8x128xi32>
    %cst = arith.constant dense<0> : vector<8x8xi32>
    %14 = vector.multi_reduction <add>, %13, %cst [2] : vector<8x8x128xi32> to vector<8x8xi32>
    %15 = arith.addi %12, %14 : vector<8x8xi32>
    %c0_6 = arith.constant 0 : index
    %c0_7 = arith.constant 0 : index
    %16 = vector.load %arg4[%c0_6, %c0_7] : memref<8x8xi32, #tpu.memory_space<vmem>>, vector<8x8xi32>
    tpu.vector_store %arg4[%c0_6, %c0_7], %15 {strides = array<i32>} : memref<8x8xi32, #tpu.memory_space<vmem>>, vector<8x8xi32>,
    %c0_i32_8 = arith.constant 0 : i32
    %17 = arith.cmpi eq, %arg1, %c0_i32_8 : i32
    %18 = arith.extui %17 : i1 to i32
    %c0_i32_9 = arith.constant 0 : i32
    %19 = arith.cmpi ne, %18, %c0_i32_9 : i32
    scf.if %19 {
      %c0_10 = arith.constant 0 : index
      %c0_11 = arith.constant 0 : index
      %20 = vector.load %arg4[%c0_10, %c0_11] : memref<8x8xi32, #tpu.memory_space<vmem>>, vector<8x8xi32>
      %cst_12 = arith.constant dense<-2147483648> : vector<8xi32>
      %21 = vector.multi_reduction <maxsi>, %20, %cst_12 [0] : vector<8x8xi32> to vector<8xi32>
      %22 = vector.shape_cast %21 : vector<8xi32> to vector<1x8xi32>
      %23 = tpu.iota {dimensions = array<i32: 0>} : vector<8x8xi32>
      %24 = vector.broadcast %22 : vector<1x8xi32> to vector<8x8xi32>
      %25 = arith.cmpi eq, %20, %24 : vector<8x8xi32>
      %c8_i32 = arith.constant 8 : i32
      %26 = vector.broadcast %c8_i32 : i32 to vector<8x8xi32>
      %27 = arith.select %25, %23, %26 : vector<8x8xi1>, vector<8x8xi32>
      %cst_13 = arith.constant dense<2147483647> : vector<8xi32>
      %28 = vector.multi_reduction <minsi>, %27, %cst_13 [0] : vector<8x8xi32> to vector<8xi32>
      %29 = vector.shape_cast %28 : vector<8xi32> to vector<1x8xi32>
      %c0_14 = arith.constant 0 : index
      %c0_15 = arith.constant 0 : index
      %30 = vector.load %arg5[%c0_14, %c0_15] : memref<1x8xi32, #tpu.memory_space<vmem>>, vector<1x8xi32>
      tpu.vector_store %arg5[%c0_14, %c0_15], %29 {strides = array<i32>} : memref<1x8xi32, #tpu.memory_space<vmem>>, vector<1x8xi32>,
    } else {
    }
    return
  }
  func.func @transform_0(%arg0: i32, %arg1: i32) -> (i32, i32) {
    %c0_i32 = arith.constant 0 : i32
    return %arg0, %arg1 : i32, i32
  }
  func.func @transform_1(%arg0: i32, %arg1: i32) -> (i32, i32) {
    %c0_i32 = arith.constant 0 : i32
    %c0_i32_0 = arith.constant 0 : i32
    return %c0_i32, %arg1 : i32, i32
  }
  func.func @transform_2(%arg0: i32, %arg1: i32) -> (i32, i32) {
    %c0_i32 = arith.constant 0 : i32
    %c0_i32_0 = arith.constant 0 : i32
    return %c0_i32, %arg0 : i32, i32
  }
  func.func @transform_3(%arg0: i32, %arg1: i32) -> (i32, i32) {
    %c0_i32 = arith.constant 0 : i32
    %c0_i32_0 = arith.constant 0 : i32
    return %c0_i32, %arg0 : i32, i32
  }
}

</mosaic_0001>

<llo_original>
// kernel: tpu_custom_call.1
$region0: #{tpu_custom_call.1}
  #allocation0 [shape = 'u32[]', space=smem, size = 0x4, offset = 0x4, fixed_abs, tag = 'smem constant byte address 0x4 - core index']
  #allocation1 [shape = 'u32[144,128]{1,0:T(1,128)}', space=vmem, size = 0x12000, scoped, tag = 'internal scratch']
  %s0 = inlined_call_operand.hbm [shape: s16[8,128], index: 0, kind: input, shape index: {}]
  %s1 = inlined_call_operand.hbm [shape: s16[8,128], index: 1, kind: input, shape index: {}]
  %s2 = inlined_call_operand.hbm [shape: s32[8,8], index: 2, kind: output, shape index: {0}]
  %s3 = inlined_call_operand.hbm [shape: s32[1,8], index: 3, kind: output, shape index: {1}]
  %4 = xla_tuple %s2, %s3
  %s5 = sld [smem:[#allocation0]]
  $region42: #{tpu_custom_call.1} parent=0
    _
  %s7 = ssub.s32 1, %s5
  %s8 = scalar_select 0, %s7, %s5
  $region1: #{tpu_custom_call.1} parent=0
    #allocation2 [shape = 'u8[2048]{0}', space=vmem, size = 0x800, scoped, tag = 'input window, operand 0, single buffered']
    #allocation3 [shape = 's32[1]{0}', space=sflag, size = 0x4, scoped, tag = 'scoped memory for tpu_custom_call.1']
    #allocation4 [shape = 's32[1]{0}', space=sflag, size = 0x4, scoped, tag = 'scoped memory for tpu_custom_call.1']
    #allocation5 [shape = 'u8[2048]{0}', space=vmem, size = 0x800, scoped, tag = 'input window, operand 1, single buffered']
    #allocation6 [shape = 's32[1]{0}', space=sflag, size = 0x4, scoped, tag = 'scoped memory for tpu_custom_call.1']
    #allocation7 [shape = 'u8[4096]{0}', space=vmem, size = 0x1000, scoped, tag = 'output window, operand 0, single buffered']
    #allocation8 [shape = 'u8[512]{0}', space=vmem, size = 0x400, scoped, tag = 'output window, operand 1, single buffered']
    #allocation9 [shape = 's32[1]{0}', space=sflag, size = 0x4, scoped, tag = 'scoped memory for tpu_custom_call.1']
    %9 = vsyncpa [#allocation3], 0
    %10 = vsyncpa [#allocation6], 0
    %11 = vsyncpa [#allocation4], 0
    %12 = vsyncpa [#allocation9], 0
    // Predicated region
    $region2: #{tpu_custom_call.1} parent=1 // pred_check
      _
    $region3: #{tpu_custom_call.1} parent=1 // pred_check_branch
      %14 = sbr.rel (0) target = $region5
    $region4: #{tpu_custom_call.1} parent=1 // pred_region
      %s16 = ssub.s32 64, 64
      %17 = vsyncadd [#allocation3], %s16
      %s19 = sshll.u32 [#allocation2], 4
      %s20 = int_to_ptr.vmem [resolvable:$true] %s19
      %22 = dma.hbm_to_vmem [thread:$0]  %s0, 64, %s20, [#allocation3]
    $region5: #{tpu_custom_call.1} parent=1 // pred_fallthru
      _
    // Predicated region
    $region6: #{tpu_custom_call.1} parent=1 // pred_check
      _
    $region7: #{tpu_custom_call.1} parent=1 // pred_check_branch
      %24 = sbr.rel (0) target = $region9
    $region8: #{tpu_custom_call.1} parent=1 // pred_region
      %s26 = ssub.s32 64, 64
      %27 = vsyncadd [#allocation6], %s26
      %s29 = sshll.u32 [#allocation5], 4
      %s30 = int_to_ptr.vmem [resolvable:$true] %s29
      %32 = dma.hbm_to_vmem [thread:$0]  %s1, 64, %s30, [#allocation6]
    $region9: #{tpu_custom_call.1} parent=1 // pred_fallthru
      _
    // Predicated region
    $region10: #{tpu_custom_call.1} parent=1 // pred_check
      _
    $region11: #{tpu_custom_call.1} parent=1 // pred_check_branch
      %34 = sbr.rel (0) target = $region13
    $region12: #{tpu_custom_call.1} parent=1 // pred_region
      %35 = dma.done [#allocation3], 64
    $region13: #{tpu_custom_call.1} parent=1 // pred_fallthru
      _
    // Predicated region
    $region14: #{tpu_custom_call.1} parent=1 // pred_check
      _
    $region15: #{tpu_custom_call.1} parent=1 // pred_check_branch
      %37 = sbr.rel (0) target = $region17
    $region16: #{tpu_custom_call.1} parent=1 // pred_region
      %38 = dma.done [#allocation6], 64
    $region17: #{tpu_custom_call.1} parent=1 // pred_fallthru
      _
    %p39 = scmp.eq.s32.totalorder 0, 0
    // Predicated region
    $region18: #{tpu_custom_call.1} parent=1 // pred_check
      %p40 = pneg %p39
    $region19: #{tpu_custom_call.1} parent=1 // pred_check_branch
      %42 = sbr.rel (%p40) target = $region21
    $region20: #{tpu_custom_call.1} parent=1 // pred_region
      %vm43 = vcmask 64512
      %44 = vst.msk [vmem:[#allocation7] sm:$0xff] %vm43, 0
    $region21: #{tpu_custom_call.1} parent=1 // pred_fallthru
      _
    %v45 = vld [vmem:[#allocation2] sm:$0xf]
    %v46 = vunpack.c.l.b16 %v45
    %v47 = vld [vmem:[#allocation5] sm:$0xf]
    %v48 = vunpack.c.l.b16 %v47
    %v49 = vcombine.high %v48, %v48
    %v51 = vunpack.c.l.s4 1966171168
    %v52 = vunpack.c.0.s8 %v51
    %v53 = vlaneseq
    %v54 = vshrl.u32 %v53, 7
    %v55 = vsub.s32 %v52, %v54
    %v56 = vrot.slane %v48, %v55
    %v58 = vunpack.c.l.s4 1966171168
    %v59 = vunpack.c.0.s8 %v58
    %v60 = vlaneseq
    %v61 = vshrl.u32 %v60, 7
    %v62 = vsub.s32 %v59, %v61
    %v63 = vrot.slane %v49, %v62
    %v64 = vcombine.high %v56, %v56
    %v65 = vcombine.high %v63, %v63
    %v67 = vunpack.c.l.s4 1966171168
    %v68 = vunpack.c.0.s8 %v67
    %v69 = vlaneseq
    %v70 = vshrl.u32 %v69, 7
    %v71 = vsub.s32 %v68, %v70
    %v72 = vrot.slane %v56, %v71
    %v74 = vunpack.c.l.s4 1966171168
    %v75 = vunpack.c.0.s8 %v74
    %v76 = vlaneseq
    %v77 = vshrl.u32 %v76, 7
    %v78 = vsub.s32 %v75, %v77
    %v79 = vrot.slane %v63, %v78
    %v81 = vunpack.c.l.s4 1966171168
    %v82 = vunpack.c.0.s8 %v81
    %v83 = vlaneseq
    %v84 = vshrl.u32 %v83, 7
    %v85 = vsub.s32 %v82, %v84
    %v86 = vrot.slane %v64, %v85
    %v88 = vunpack.c.l.s4 1966171168
    %v89 = vunpack.c.0.s8 %v88
    %v90 = vlaneseq
    %v91 = vshrl.u32 %v90, 7
    %v92 = vsub.s32 %v89, %v91
    %v93 = vrot.slane %v65, %v92
    %v94 = vcombine.high %v72, %v72
    %v95 = vcombine.high %v79, %v79
    %v96 = vcombine.high %v86, %v86
    %v97 = vcombine.high %v93, %v93
    %v98 = vlaneseq
    %v99 = vshrl.u32 %v98, 7
    %v100 = vsub.s32 0, %v99
    %v101 = vrot.slane %v72, %v100
    %v102 = vlaneseq
    %v103 = vshrl.u32 %v102, 7
    %v104 = vsub.s32 0, %v103
    %v105 = vrot.slane %v86, %v104
    %v106 = vlaneseq
    %v107 = vshrl.u32 %v106, 7
    %v108 = vsub.s32 0, %v107
    %v109 = vrot.slane %v94, %v108
    %v110 = vlaneseq
    %v111 = vshrl.u32 %v110, 7
    %v112 = vsub.s32 0, %v111
    %v113 = vrot.slane %v96, %v112
    %v114 = vlaneseq
    %v115 = vshrl.u32 %v114, 7
    %v116 = vsub.s32 0, %v115
    %v117 = vrot.slane %v79, %v116
    %v118 = vlaneseq
    %v119 = vshrl.u32 %v118, 7
    %v120 = vsub.s32 0, %v119
    %v121 = vrot.slane %v93, %v120
    %v122 = vlaneseq
    %v123 = vshrl.u32 %v122, 7
    %v124 = vsub.s32 0, %v123
    %v125 = vrot.slane %v95, %v124
    %v126 = vlaneseq
    %v127 = vshrl.u32 %v126, 7
    %v128 = vsub.s32 0, %v127
    %v129 = vrot.slane %v97, %v128
    %vm130 = vcmp.eq.s32.totalorder %v101, %v46
    %vm131 = vcmp.eq.s32.totalorder %v105, %v46
    %vm132 = vcmp.eq.s32.totalorder %v109, %v46
    %vm133 = vcmp.eq.s32.totalorder %v113, %v46
    %vm134 = vcmp.eq.s32.totalorder %v117, %v46
    %vm135 = vcmp.eq.s32.totalorder %v121, %v46
    %vm136 = vcmp.eq.s32.totalorder %v125, %v46
    %vm137 = vcmp.eq.s32.totalorder %v129, %v46
    %v138 = vld [vmem:[#allocation7] sm:$0xff]
    %v139 = vsel %vm130, 1, 0
    %v140 = vsel %vm131, 1, 0
    %v141 = vsel %vm132, 1, 0
    %v142 = vsel %vm133, 1, 0
    %v143 = vsel %vm134, 1, 0
    %v144 = vsel %vm135, 1, 0
    %v145 = vsel %vm136, 1, 0
    %v146 = vsel %vm137, 1, 0
    %v147 = vand.u32 %v139, 65535
    %v148 = vshrl.u32 %v139, 16
    %v149 = vcvt.s32.f32 %v147
    %v150 = vcvt.s32.f32 %v148
    %151 = vadd.xlane.f32.xlu0 %v149
    %v152 = vpop.xlane.xlu0 %151
    %153 = vadd.xlane.f32.xlu0 %v150
    %v154 = vpop.xlane.xlu0 %153
    %v155 = vcvt.f32.s32 %v152
    %v156 = vcvt.f32.s32 %v154
    %v157 = vshll.u32 %v156, 16
    %v158 = vadd.s32 %v157, %v155
    %v159 = vand.u32 %v140, 65535
    %v160 = vshrl.u32 %v140, 16
    %v161 = vcvt.s32.f32 %v159
    %v162 = vcvt.s32.f32 %v160
    %163 = vadd.xlane.f32.xlu0 %v161
    %v164 = vpop.xlane.xlu0 %163
    %165 = vadd.xlane.f32.xlu0 %v162
    %v166 = vpop.xlane.xlu0 %165
    %v167 = vcvt.f32.s32 %v164
    %v168 = vcvt.f32.s32 %v166
    %v169 = vshll.u32 %v168, 16
    %v170 = vadd.s32 %v169, %v167
    %v171 = vand.u32 %v141, 65535
    %v172 = vshrl.u32 %v141, 16
    %v173 = vcvt.s32.f32 %v171
    %v174 = vcvt.s32.f32 %v172
    %175 = vadd.xlane.f32.xlu0 %v173
    %v176 = vpop.xlane.xlu0 %175
    %177 = vadd.xlane.f32.xlu0 %v174
    %v178 = vpop.xlane.xlu0 %177
    %v179 = vcvt.f32.s32 %v176
    %v180 = vcvt.f32.s32 %v178
    %v181 = vshll.u32 %v180, 16
    %v182 = vadd.s32 %v181, %v179
    %v183 = vand.u32 %v142, 65535
    %v184 = vshrl.u32 %v142, 16
    %v185 = vcvt.s32.f32 %v183
    %v186 = vcvt.s32.f32 %v184
    %187 = vadd.xlane.f32.xlu0 %v185
    %v188 = vpop.xlane.xlu0 %187
    %189 = vadd.xlane.f32.xlu0 %v186
    %v190 = vpop.xlane.xlu0 %189
    %v191 = vcvt.f32.s32 %v188
    %v192 = vcvt.f32.s32 %v190
    %v193 = vshll.u32 %v192, 16
    %v194 = vadd.s32 %v193, %v191
    %v195 = vand.u32 %v143, 65535
    %v196 = vshrl.u32 %v143, 16
    %v197 = vcvt.s32.f32 %v195
    %v198 = vcvt.s32.f32 %v196
    %199 = vadd.xlane.f32.xlu0 %v197
    %v200 = vpop.xlane.xlu0 %199
    %201 = vadd.xlane.f32.xlu0 %v198
    %v202 = vpop.xlane.xlu0 %201
    %v203 = vcvt.f32.s32 %v200
    %v204 = vcvt.f32.s32 %v202
    %v205 = vshll.u32 %v204, 16
    %v206 = vadd.s32 %v205, %v203
    %v207 = vand.u32 %v144, 65535
    %v208 = vshrl.u32 %v144, 16
    %v209 = vcvt.s32.f32 %v207
    %v210 = vcvt.s32.f32 %v208
    %211 = vadd.xlane.f32.xlu0 %v209
    %v212 = vpop.xlane.xlu0 %211
    %213 = vadd.xlane.f32.xlu0 %v210
    %v214 = vpop.xlane.xlu0 %213
    %v215 = vcvt.f32.s32 %v212
    %v216 = vcvt.f32.s32 %v214
    %v217 = vshll.u32 %v216, 16
    %v218 = vadd.s32 %v217, %v215
    %v219 = vand.u32 %v145, 65535
    %v220 = vshrl.u32 %v145, 16
    %v221 = vcvt.s32.f32 %v219
    %v222 = vcvt.s32.f32 %v220
    %223 = vadd.xlane.f32.xlu0 %v221
    %v224 = vpop.xlane.xlu0 %223
    %225 = vadd.xlane.f32.xlu0 %v222
    %v226 = vpop.xlane.xlu0 %225
    %v227 = vcvt.f32.s32 %v224
    %v228 = vcvt.f32.s32 %v226
    %v229 = vshll.u32 %v228, 16
    %v230 = vadd.s32 %v229, %v227
    %v231 = vand.u32 %v146, 65535
    %v232 = vshrl.u32 %v146, 16
    %v233 = vcvt.s32.f32 %v231
    %v234 = vcvt.s32.f32 %v232
    %235 = vadd.xlane.f32.xlu0 %v233
    %v236 = vpop.xlane.xlu0 %235
    %237 = vadd.xlane.f32.xlu0 %v234
    %v238 = vpop.xlane.xlu0 %237
    %v239 = vcvt.f32.s32 %v236
    %v240 = vcvt.f32.s32 %v238
    %v241 = vshll.u32 %v240, 16
    %v242 = vadd.s32 %v241, %v239
    %v243 = vlaneseq
    %v244 = vand.u32 %v243, 127
    %v245 = vlaneseq
    %v246 = vshrl.u32 %v245, 7
    %v247 = vsub.s32 %v244, %v246
    %v248 = vrot.slane %v158, %v247
    %v249 = vlaneseq
    %v250 = vshrl.u32 %v249, 7
    %v251 = vsub.s32 %v244, %v250
    %v252 = vrot.slane %v170, %v251
    %v253 = vlaneseq
    %v254 = vshrl.u32 %v253, 7
    %v255 = vsub.s32 %v244, %v254
    %v256 = vrot.slane %v182, %v255
    %v257 = vlaneseq
    %v258 = vshrl.u32 %v257, 7
    %v259 = vsub.s32 %v244, %v258
    %v260 = vrot.slane %v194, %v259
    %v261 = vlaneseq
    %v262 = vshrl.u32 %v261, 7
    %v263 = vsub.s32 %v244, %v262
    %v264 = vrot.slane %v206, %v263
    %v265 = vlaneseq
    %v266 = vshrl.u32 %v265, 7
    %v267 = vsub.s32 %v244, %v266
    %v268 = vrot.slane %v218, %v267
    %v269 = vlaneseq
    %v270 = vshrl.u32 %v269, 7
    %v271 = vsub.s32 %v244, %v270
    %v272 = vrot.slane %v230, %v271
    %v273 = vlaneseq
    %v274 = vshrl.u32 %v273, 7
    %v275 = vsub.s32 %v244, %v274
    %v276 = vrot.slane %v242, %v275
    %vm277 = vcmask 1041409
    %v278 = vsel %vm277, %v252, %v248
    %vm279 = vcmask 1042434
    %v280 = vsel %vm279, %v256, %v278
    %vm281 = vcmask 1043459
    %v282 = vsel %vm281, %v260, %v280
    %vm283 = vcmask 1044484
    %v284 = vsel %vm283, %v264, %v282
    %vm285 = vcmask 1045509
    %v286 = vsel %vm285, %v268, %v284
    %vm287 = vcmask 1046534
    %v288 = vsel %vm287, %v272, %v286
    %vm289 = vcmask 1047559
    %v290 = vsel %vm289, %v276, %v288
    %v291 = vadd.s32 %v138, %v290
    %vm292 = vcmask 64512
    %293 = vst.msk [vmem:[#allocation7] sm:$0xff] %vm292, %v291
    // Predicated region
    $region22: #{tpu_custom_call.1} parent=1 // pred_check
      %p294 = pneg %p39
    $region23: #{tpu_custom_call.1} parent=1 // pred_check_branch
      %296 = sbr.rel (%p294) target = $region25
    $region24: #{tpu_custom_call.1} parent=1 // pred_region
      %v297 = vld [vmem:[#allocation7] sm:$0xff]
      %v298 = vsel %vm292, %v297, 2147483648
      %v299 = vrot.slane %v298, 4
      %vm300 = vcmp.gt.s32.totalorder %v298, %v299
      %v301 = vsel %vm300, %v298, %v299
      %v302 = vrot.slane %v301, 2
      %vm303 = vcmp.gt.s32.totalorder %v301, %v302
      %v304 = vsel %vm303, %v301, %v302
      %v305 = vrot.slane %v304, 1
      %vm306 = vcmp.gt.s32.totalorder %v304, %v305
      %v307 = vsel %vm306, %v304, %v305
      %v308 = vlaneseq
      %v309 = vshrl.u32 %v308, 7
      %vm310 = vcmp.eq.s32.totalorder %v297, %v307
      %v311 = vsel %vm310, %v309, 8
      %v312 = vsel %vm292, %v311, 2147483647
      %v313 = vrot.slane %v312, 4
      %vm314 = vcmp.lt.s32.totalorder %v312, %v313
      %v315 = vsel %vm314, %v312, %v313
      %v316 = vrot.slane %v315, 2
      %vm317 = vcmp.lt.s32.totalorder %v315, %v316
      %v318 = vsel %vm317, %v315, %v316
      %v319 = vrot.slane %v318, 1
      %vm320 = vcmp.lt.s32.totalorder %v318, %v319
      %v321 = vsel %vm320, %v318, %v319
      %vm322 = vcmask 57344
      %323 = vst.msk [vmem:[#allocation8] sm:$0x1] %vm322, %v321
    $region25: #{tpu_custom_call.1} parent=1 // pred_fallthru
      _
    // Predicated region
    $region26: #{tpu_custom_call.1} parent=1 // pred_check
      _
    $region27: #{tpu_custom_call.1} parent=1 // pred_check_branch
      %325 = sbr.rel (0) target = $region29
    $region28: #{tpu_custom_call.1} parent=1 // pred_region
      %s327 = ssub.s32 128, 128
      %328 = vsyncadd [#allocation4], %s327
      %s330 = sshll.u32 [#allocation7], 4
      %s331 = int_to_ptr.vmem [resolvable:$true] %s330
      %333 = dma.vmem_to_hbm [thread:$0]  %s331, 128, %s2, [#allocation4]
    $region29: #{tpu_custom_call.1} parent=1 // pred_fallthru
      _
    // Predicated region
    $region30: #{tpu_custom_call.1} parent=1 // pred_check
      _
    $region31: #{tpu_custom_call.1} parent=1 // pred_check_branch
      %335 = sbr.rel (0) target = $region33
    $region32: #{tpu_custom_call.1} parent=1 // pred_region
      %s337 = ssub.s32 16, 16
      %338 = vsyncadd [#allocation9], %s337
      %s340 = sshll.u32 [#allocation8], 4
      %s341 = int_to_ptr.vmem [resolvable:$true] %s340
      %343 = dma.vmem_to_hbm [thread:$0]  %s341, 16, %s3, [#allocation9]
    $region33: #{tpu_custom_call.1} parent=1 // pred_fallthru
      _
    // Predicated region
    $region34: #{tpu_custom_call.1} parent=1 // pred_check
      _
    $region35: #{tpu_custom_call.1} parent=1 // pred_check_branch
      %345 = sbr.rel (0) target = $region37
    $region36: #{tpu_custom_call.1} parent=1 // pred_region
      %346 = dma.done [#allocation4], 128
    $region37: #{tpu_custom_call.1} parent=1 // pred_fallthru
      _
    // Predicated region
    $region38: #{tpu_custom_call.1} parent=1 // pred_check
      _
    $region39: #{tpu_custom_call.1} parent=1 // pred_check_branch
      %348 = sbr.rel (0) target = $region41
    $region40: #{tpu_custom_call.1} parent=1 // pred_region
      %349 = dma.done [#allocation9], 16
    $region41: #{tpu_custom_call.1} parent=1 // pred_fallthru
      _
    %350 = vsyncpa [#allocation3], 1
    %351 = vsyncpa [#allocation6], 1
    %352 = vsyncpa [#allocation4], 1
    %353 = vsyncpa [#allocation9], 1

</llo_original>
